<compile_context>
chip_gen: v7x
topology: tpu7x:2x2x1
jax: 0.10.0
libtpu: 0.0.40
codegen_flags: <defaults>
</compile_context>

<pallas_src>
import functools

import jax
import jax.numpy as jnp
from jax.experimental import pallas as pl
from jax.experimental.pallas import tpu as pltpu


def _round_up(x: int, m: int) -> int:
    return ((x + m - 1) // m) * m


def _is_all_ones(x) -> bool:
    """Trace-time specialization check; False if x is a tracer."""
    try:
        return bool(jnp.all(x == 1.0))
    except Exception:  # traced under jit/vmap -> cannot specialize
        return False


def _rule_weight_kernel(alpha_ref, delta_ref, theta_ref, out_ref, *, delta_is_ones):
    # alpha_ref: [A, K, TB]  (batch tile on lanes, rules on sublanes)
    # delta_ref: [A, K, 1]   (constant across the batch grid)
    # theta_ref: [K, 1]
    # out_ref  : [K, TB]
    num_a = alpha_ref.shape[0]

    if delta_is_ones:
        # delta == 1 everywhere: plain product over attributes.
        # Pure VPU multiplies, exact, no transcendentals.
        prod = alpha_ref[0]                                    # [K, TB]
        for i in range(1, num_a):
            prod = prod * alpha_ref[i]
    else:
        # prod_i alpha^delta = exp(sum_i delta * log(alpha)).
        # delta==0 terms are masked so alpha==0, delta==0 -> 0**0 == 1
        # (otherwise 0 * log(0) = NaN in log domain).
        alpha = alpha_ref[...]                                 # [A, K, TB]
        d = delta_ref[...]                                     # [A, K, 1]
        term = jnp.where(d == 0.0, 0.0, d * jnp.log(alpha))    # [A, K, TB]
        prod = jnp.exp(jnp.sum(term, axis=0))                  # [K, TB]

    w = theta_ref[...] * prod                                  # [K, TB]

    # Normalize over the rule axis (sublane reduce), independently per lane.
    denom = jnp.sum(w, axis=0, keepdims=True)                  # [1, TB]
    out_ref[...] = w / denom                                   # exact divide


def rule_weight_layer(alpha, delta_, theta, *, block_b: int = 2048):
    """alpha: [B, K, A]; delta_: [K, A]; theta: [K] -> [B, K] (float32)."""
    B, K, A = alpha.shape
    alpha = alpha.astype(jnp.float32)
    delta3 = jnp.transpose(delta_.astype(jnp.float32), (1, 0))[:, :, None]   # [A, K, 1]
    theta2d = theta.astype(jnp.float32).reshape(K, 1)

    # Lane-dense layout: batch on the last (lane) axis.
    alpha_t = jnp.transpose(alpha, (2, 1, 0))                  # [A, K, B]

    # Batch tile: multiple of 128 lanes; pad B so every store is a full,
    # unmasked 128-lane vst. Padding value 1.0 keeps log/exp finite.
    b128 = _round_up(B, 128)
    tb = min(block_b, b128)
    b_pad = _round_up(B, tb)
    if b_pad != B:
        alpha_t = jnp.pad(alpha_t, ((0, 0), (0, 0), (0, b_pad - B)),
                          constant_values=1.0)

    delta_is_ones = _is_all_ones(delta_)
    kernel = functools.partial(_rule_weight_kernel, delta_is_ones=delta_is_ones)

    if delta_is_ones:
        flops = b_pad * K * (A - 1) + 3 * b_pad * K
        transcendentals = 0
    else:
        flops = 2 * b_pad * K * A + 3 * b_pad * K
        transcendentals = b_pad * K * (A + 1)
    cost = pl.CostEstimate(
        flops=flops,
        transcendentals=transcendentals,
        bytes_accessed=(b_pad * K * A + A * K + K + b_pad * K) * 4,
    )

    out_t = pl.pallas_call(
        kernel,
        out_shape=jax.ShapeDtypeStruct((K, b_pad), jnp.float32),
        grid=(b_pad // tb,),
        in_specs=[
            pl.BlockSpec((A, K, tb), lambda i: (0, 0, i)),   # alpha tile (pipelined)
            pl.BlockSpec((A, K, 1), lambda i: (0, 0, 0)),    # delta: VMEM-resident
            pl.BlockSpec((K, 1), lambda i: (0, 0)),          # theta: VMEM-resident
        ],
        out_specs=pl.BlockSpec((K, tb), lambda i: (0, i)),   # lane-dense output
        compiler_params=pltpu.CompilerParams(
            dimension_semantics=("parallel",)),
        cost_estimate=cost,
    )(alpha_t, delta3, theta2d)

    # Back to the module's [B, K] layout.
    return out_t[:, :B].T


def _reference(alpha, delta_, theta):
    # pure-JAX reference mirroring the PyTorch forward
    w = theta[None, :] * jnp.prod(alpha ** delta_[None, :, :], axis=-1)
    return w / jnp.sum(w, axis=-1, keepdims=True)


if __name__ == "__main__":
    # small shapes consistent with the module: batch=8, num_k=4, num_A=8
    B, num_k, num_A = 8, 4, 8

    key = jax.random.PRNGKey(0)
    k1, k2 = jax.random.split(key)
    # matching degrees are nonnegative; keep strictly positive like a softmax output
    alpha = jax.random.uniform(k1, (B, num_k, num_A),
                               minval=0.05, maxval=1.0, dtype=jnp.float32)

    # deterministic parameter init, exactly as the module __init__ does
    theta = jnp.ones((num_k,), dtype=jnp.float32)
    delta_ = jnp.ones((num_k, num_A), dtype=jnp.float32)

    out = jax.block_until_ready(rule_weight_layer(alpha, delta_, theta))
    ref = _reference(alpha, delta_, theta)
    assert out.shape == (B, num_k)
    assert jnp.allclose(out, ref, atol=1e-4, rtol=2e-3), "mismatch (delta==1 path)"

    # general-delta path, including the 0**0 == 1 corner case
    delta2 = jax.random.uniform(k2, (num_k, num_A),
                                minval=0.5, maxval=1.5, dtype=jnp.float32)
    delta2 = delta2.at[0, 0].set(0.0)
    alpha2 = alpha.at[0, 0, 0].set(0.0)
    out2 = jax.block_until_ready(rule_weight_layer(alpha2, delta2, theta))
    ref2 = _reference(alpha2, delta2, theta)
    assert jnp.allclose(out2, ref2, atol=1e-4, rtol=2e-3), "mismatch (general delta path)"

    print("KERNEL_OK")
</pallas_src>

<mosaic_0001>
module attributes {stable_mosaic.version = 11 : i64} {
  func.func @_rule_weight_kernel(%arg0: i32, %arg1: memref<8x4x128xf32, #tpu.memory_space<vmem>>, %arg2: memref<8x4x1xf32, #tpu.memory_space<vmem>>, %arg3: memref<4x1xf32, #tpu.memory_space<vmem>>, %arg4: memref<4x128xf32, #tpu.memory_space<vmem>>) attributes {dimension_semantics = [#tpu.dimension_semantics<parallel>], iteration_bounds = array<i64: 1>, scalar_prefetch = 0 : i64, scratch_operands = 0 : i64, tpu.core_type = #tpu.core_type<tc>, window_params = [{transform_indices = @transform_0, window_bounds = array<i64: 8, 4, 128>}, {pipeline_mode = #tpu.pipeline_mode<synchronous>, transform_indices = @transform_1, window_bounds = array<i64: 8, 4, 1>}, {pipeline_mode = #tpu.pipeline_mode<synchronous>, transform_indices = @transform_2, window_bounds = array<i64: 4, 1>}, {transform_indices = @transform_3, window_bounds = array<i64: 4, 128>}]} {
    %c0 = arith.constant 0 : index
    %c0_0 = arith.constant 0 : index
    %c0_1 = arith.constant 0 : index
    %0 = vector.load %arg1[%c0, %c0_0, %c0_1] : memref<8x4x128xf32, #tpu.memory_space<vmem>>, vector<1x4x128xf32>
    %1 = vector.shape_cast %0 : vector<1x4x128xf32> to vector<4x128xf32>
    %c1 = arith.constant 1 : index
    %c0_2 = arith.constant 0 : index
    %c0_3 = arith.constant 0 : index
    %2 = vector.load %arg1[%c1, %c0_2, %c0_3] : memref<8x4x128xf32, #tpu.memory_space<vmem>>, vector<1x4x128xf32>
    %3 = vector.shape_cast %2 : vector<1x4x128xf32> to vector<4x128xf32>
    %4 = arith.mulf %1, %3 : vector<4x128xf32>
    %c2 = arith.constant 2 : index
    %c0_4 = arith.constant 0 : index
    %c0_5 = arith.constant 0 : index
    %5 = vector.load %arg1[%c2, %c0_4, %c0_5] : memref<8x4x128xf32, #tpu.memory_space<vmem>>, vector<1x4x128xf32>
    %6 = vector.shape_cast %5 : vector<1x4x128xf32> to vector<4x128xf32>
    %7 = arith.mulf %4, %6 : vector<4x128xf32>
    %c3 = arith.constant 3 : index
    %c0_6 = arith.constant 0 : index
    %c0_7 = arith.constant 0 : index
    %8 = vector.load %arg1[%c3, %c0_6, %c0_7] : memref<8x4x128xf32, #tpu.memory_space<vmem>>, vector<1x4x128xf32>
    %9 = vector.shape_cast %8 : vector<1x4x128xf32> to vector<4x128xf32>
    %10 = arith.mulf %7, %9 : vector<4x128xf32>
    %c4 = arith.constant 4 : index
    %c0_8 = arith.constant 0 : index
    %c0_9 = arith.constant 0 : index
    %11 = vector.load %arg1[%c4, %c0_8, %c0_9] : memref<8x4x128xf32, #tpu.memory_space<vmem>>, vector<1x4x128xf32>
    %12 = vector.shape_cast %11 : vector<1x4x128xf32> to vector<4x128xf32>
    %13 = arith.mulf %10, %12 : vector<4x128xf32>
    %c5 = arith.constant 5 : index
    %c0_10 = arith.constant 0 : index
    %c0_11 = arith.constant 0 : index
    %14 = vector.load %arg1[%c5, %c0_10, %c0_11] : memref<8x4x128xf32, #tpu.memory_space<vmem>>, vector<1x4x128xf32>
    %15 = vector.shape_cast %14 : vector<1x4x128xf32> to vector<4x128xf32>
    %16 = arith.mulf %13, %15 : vector<4x128xf32>
    %c6 = arith.constant 6 : index
    %c0_12 = arith.constant 0 : index
    %c0_13 = arith.constant 0 : index
    %17 = vector.load %arg1[%c6, %c0_12, %c0_13] : memref<8x4x128xf32, #tpu.memory_space<vmem>>, vector<1x4x128xf32>
    %18 = vector.shape_cast %17 : vector<1x4x128xf32> to vector<4x128xf32>
    %19 = arith.mulf %16, %18 : vector<4x128xf32>
    %c7 = arith.constant 7 : index
    %c0_14 = arith.constant 0 : index
    %c0_15 = arith.constant 0 : index
    %20 = vector.load %arg1[%c7, %c0_14, %c0_15] : memref<8x4x128xf32, #tpu.memory_space<vmem>>, vector<1x4x128xf32>
    %21 = vector.shape_cast %20 : vector<1x4x128xf32> to vector<4x128xf32>
    %22 = arith.mulf %19, %21 : vector<4x128xf32>
    %c0_16 = arith.constant 0 : index
    %c0_17 = arith.constant 0 : index
    %23 = vector.load %arg3[%c0_16, %c0_17] : memref<4x1xf32, #tpu.memory_space<vmem>>, vector<4x1xf32>
    %24 = vector.broadcast %23 : vector<4x1xf32> to vector<4x128xf32>
    %25 = arith.mulf %24, %22 : vector<4x128xf32>
    %cst = arith.constant dense<0.000000e+00> : vector<128xf32>
    %26 = vector.multi_reduction <add>, %25, %cst [0] : vector<4x128xf32> to vector<128xf32>
    %27 = vector.shape_cast %26 : vector<128xf32> to vector<1x128xf32>
    %28 = vector.broadcast %27 : vector<1x128xf32> to vector<4x128xf32>
    %29 = arith.divf %25, %28 : vector<4x128xf32>
    %c0_18 = arith.constant 0 : index
    %c0_19 = arith.constant 0 : index
    %30 = vector.load %arg4[%c0_18, %c0_19] : memref<4x128xf32, #tpu.memory_space<vmem>>, vector<4x128xf32>
    tpu.vector_store %arg4[%c0_18, %c0_19], %29 {strides = array<i32>} : memref<4x128xf32, #tpu.memory_space<vmem>>, vector<4x128xf32>,
    return
  }
  func.func @transform_0(%arg0: i32) -> (i32, i32, i32) {
    %c0_i32 = arith.constant 0 : i32
    %c0_i32_0 = arith.constant 0 : i32
    %c0_i32_1 = arith.constant 0 : i32
    return %c0_i32, %c0_i32_0, %arg0 : i32, i32, i32
  }
  func.func @transform_1(%arg0: i32) -> (i32, i32, i32) {
    %c0_i32 = arith.constant 0 : i32
    %c0_i32_0 = arith.constant 0 : i32
    %c0_i32_1 = arith.constant 0 : i32
    %c0_i32_2 = arith.constant 0 : i32
    return %c0_i32, %c0_i32_0, %c0_i32_1 : i32, i32, i32
  }
  func.func @transform_2(%arg0: i32) -> (i32, i32) {
    %c0_i32 = arith.constant 0 : i32
    %c0_i32_0 = arith.constant 0 : i32
    %c0_i32_1 = arith.constant 0 : i32
    return %c0_i32, %c0_i32_0 : i32, i32
  }
  func.func @transform_3(%arg0: i32) -> (i32, i32) {
    %c0_i32 = arith.constant 0 : i32
    %c0_i32_0 = arith.constant 0 : i32
    return %c0_i32, %arg0 : i32, i32
  }
}

</mosaic_0001>

<llo_original>
// kernel: tpu_custom_call.1
$region0: #{tpu_custom_call.1}
  #allocation0 [shape = 'u32[]', space=smem, size = 0x4, offset = 0x4, fixed_abs, tag = 'smem constant byte address 0x4 - core index']
  #allocation1 [shape = 'u32[144,128]{1,0:T(1,128)}', space=vmem, size = 0x12000, scoped, tag = 'internal scratch']
  %s0 = inlined_call_operand.vmem [shape: f32[8,4,128], index: 0, kind: input, shape index: {}]
  %s1 = inlined_call_operand.vmem [shape: f32[8,4,1], index: 1, kind: input, shape index: {}]
  %s2 = inlined_call_operand.vmem [shape: f32[4,1], index: 2, kind: input, shape index: {}]
  %s3 = inlined_call_operand.hbm [shape: f32[4,128], index: 3, kind: output, shape index: {}]
  %s4 = sld [smem:[#allocation0]]
  $region22: #{tpu_custom_call.1} parent=0
    _
  %s6 = ssub.s32 1, %s4
  %s7 = scalar_select 0, %s6, %s4
  $region1: #{tpu_custom_call.1} parent=0
    #allocation2 [shape = 'u8[2048]{0}', space=vmem, size = 0x800, scoped, tag = 'output window, operand 0, single buffered']
    #allocation3 [shape = 's32[1]{0}', space=sflag, size = 0x4, scoped, tag = 'scoped memory for tpu_custom_call.1']
    %8 = vsyncpa [#allocation3], 0
    // Predicated region
    $region2: #{tpu_custom_call.1} parent=1 // pred_check
      _
    $region3: #{tpu_custom_call.1} parent=1 // pred_check_branch
      %10 = sbr.rel (0) target = $region5
    $region4: #{tpu_custom_call.1} parent=1 // pred_region
      _
    $region5: #{tpu_custom_call.1} parent=1 // pred_fallthru
      _
    // Predicated region
    $region6: #{tpu_custom_call.1} parent=1 // pred_check
      _
    $region7: #{tpu_custom_call.1} parent=1 // pred_check_branch
      %12 = sbr.rel (0) target = $region9
    $region8: #{tpu_custom_call.1} parent=1 // pred_region
      _
    $region9: #{tpu_custom_call.1} parent=1 // pred_fallthru
      _
    // Predicated region
    $region10: #{tpu_custom_call.1} parent=1 // pred_check
      _
    $region11: #{tpu_custom_call.1} parent=1 // pred_check_branch
      %14 = sbr.rel (0) target = $region13
    $region12: #{tpu_custom_call.1} parent=1 // pred_region
      _
    $region13: #{tpu_custom_call.1} parent=1 // pred_fallthru
      _
    %v15 = vld [vmem:[%s0] sm:$0xf]
    %s16 = scalar_lea.vmem %s0, 4
    %v17 = vld [vmem:[%s16] sm:$0xf]
    %v18 = vmul.f32 %v15, %v17
    %s19 = scalar_lea.vmem %s0, 8
    %v20 = vld [vmem:[%s19] sm:$0xf]
    %v21 = vmul.f32 %v18, %v20
    %s22 = scalar_lea.vmem %s0, 12
    %v23 = vld [vmem:[%s22] sm:$0xf]
    %v24 = vmul.f32 %v21, %v23
    %s25 = scalar_lea.vmem %s0, 16
    %v26 = vld [vmem:[%s25] sm:$0xf]
    %v27 = vmul.f32 %v24, %v26
    %s28 = scalar_lea.vmem %s0, 20
    %v29 = vld [vmem:[%s28] sm:$0xf]
    %v30 = vmul.f32 %v27, %v29
    %s31 = scalar_lea.vmem %s0, 24
    %v32 = vld [vmem:[%s31] sm:$0xf]
    %v33 = vmul.f32 %v30, %v32
    %s34 = scalar_lea.vmem %s0, 28
    %v35 = vld [vmem:[%s34] sm:$0xf]
    %v36 = vmul.f32 %v33, %v35
    %v37 = vld [vmem:[%s2] sm:$0xf]
    %39 = vset.pattern.permute.xlu0 0
    %40 = vperm.xlu0 %39, %v37
    %v41 = vpop.permute.xlu0 %40
    %v43 = vmul.f32 %v41, %v36
    %vm44 = vcmask 1043456
    %v45 = vsel %vm44, %v43, 0.0
    %v46 = vrot.slane %v45, 4
    %v47 = vadd.f32 %v45, %v46
    %v48 = vrot.slane %v47, 2
    %v49 = vadd.f32 %v47, %v48
    %v50 = vrot.slane %v49, 1
    %v51 = vadd.f32 %v49, %v50
    %v52 = vrcp.pop %v51
    %v53 = vmul.f32 %v43, %v52
    %54 = vst [vmem:[#allocation2] sm:$0xf] %v53
    // Predicated region
    $region14: #{tpu_custom_call.1} parent=1 // pred_check
      _
    $region15: #{tpu_custom_call.1} parent=1 // pred_check_branch
      %56 = sbr.rel (0) target = $region17
    $region16: #{tpu_custom_call.1} parent=1 // pred_region
      %s58 = ssub.s32 64, 64
      %59 = vsyncadd [#allocation3], %s58
      %s61 = sshll.u32 [#allocation2], 4
      %s62 = int_to_ptr.vmem [resolvable:$true] %s61
      %64 = dma.vmem_to_hbm [thread:$0]  %s62, 64, %s3, [#allocation3]
    $region17: #{tpu_custom_call.1} parent=1 // pred_fallthru
      _
    // Predicated region
    $region18: #{tpu_custom_call.1} parent=1 // pred_check
      _
    $region19: #{tpu_custom_call.1} parent=1 // pred_check_branch
      %66 = sbr.rel (0) target = $region21
    $region20: #{tpu_custom_call.1} parent=1 // pred_region
      %67 = dma.done [#allocation3], 64
    $region21: #{tpu_custom_call.1} parent=1 // pred_fallthru
      _
    %68 = vsyncpa [#allocation3], 1

</llo_original>
